<compile_context>
chip_gen: v7x
topology: tpu7x:2x2x1
jax: 0.10.0
libtpu: 0.0.40
codegen_flags: <defaults>
</compile_context>

<pallas_src>
import functools
import math

import jax
import jax.numpy as jnp
from jax.experimental import pallas as pl
from jax.experimental.pallas import tpu as pltpu

# Conv hyperparameters (fixed by the PyTorch module).
CIN, C1, C2 = 3, 16, 4
KH1 = KW1 = 7
KH2 = KW2 = 5
STRIDE1, DIL1 = 2, 2          # conv1: stride=2, dilation=2
assert STRIDE1 == DIL1 == 2   # even-phase-downsample rewrite requires this


def _make_lowered_weight(w, in_pos, out_pos):
    """Toeplitz-expand an HWIO conv weight into a single row-matmul weight.

    w: (KH, KW, Cin, Cout) -> M: (KH*in_pos*Cin, out_pos*Cout) with
      M[kh*in_pos*Cin + p*Cin + ci, ow*Cout + co] = w[kh, p-ow, ci, co]
    (zero where p-ow is outside [0, KW)), so that
      out_rows[oh] = lhs_row[oh] @ M,   lhs_row[oh] = concat_kh x_rows[oh+kh].
    """
    KH, KW, Cin, Cout = w.shape
    d = jnp.arange(in_pos)[:, None] - jnp.arange(out_pos)[None, :]   # (in, out)
    valid = (d >= 0) & (d < KW)
    m = w[:, jnp.clip(d, 0, KW - 1), :, :]             # (KH, in, out, Cin, Cout)
    m = jnp.where(valid[None, :, :, None, None], m, 0.0)
    m = jnp.transpose(m, (0, 1, 3, 2, 4))               # (KH, in, Cin, out, Cout)
    return m.reshape(KH * in_pos * Cin, out_pos * Cout)


def _make_kernel(nb, oh1, oh2, kh2):
    """Build the fused kernel for NB batch elements per grid step (all static)."""

    def kernel(x_ref, w1_ref, b1_ref, w2_ref, b2_ref, o_ref):
        # conv1 + bias + relu: ONE MXU push, K = KH1*We*CIN, bf16 in / f32 acc.
        acc1 = jnp.dot(x_ref[0], w1_ref[...], preferred_element_type=jnp.float32)
        y1 = jnp.maximum(acc1 + b1_ref[...], 0.0)        # (nb*oh1, OW1*C1) in regs

        # conv2 im2row built entirely in registers (no VMEM round-trip):
        # per batch element, concatenate the KH2 row-shifted slices along lanes.
        rows = []
        for n in range(nb):
            base = n * oh1
            rows.append(jnp.concatenate(
                [y1[base + kh: base + kh + oh2, :] for kh in range(kh2)], axis=-1))
        lhs2 = rows[0] if nb == 1 else jnp.concatenate(rows, axis=0)

        # conv2 + bias + relu: ONE MXU push, K = KH2*OW1*C1.
        acc2 = jnp.dot(lhs2.astype(jnp.bfloat16), w2_ref[...],
                       preferred_element_type=jnp.float32)
        # Single lane-dense-as-possible store of the whole step's output slab.
        o_ref[0] = jnp.maximum(acc2 + b2_ref[...], 0.0).astype(o_ref.dtype)

    return kernel


@functools.partial(jax.jit, static_argnames=("batch_grid",))
def model_forward(x_nchw, w1, b1, w2, b2, *, batch_grid=1):
    """Reproduces Model.forward: relu(conv2(relu(conv1(x)))).

    conv1: Conv2d(3, 16, 7, stride=2, dilation=2); conv2: Conv2d(16, 4, 5).
    x_nchw: (N, 3, H, W); w1/w2 in HWIO; b1/b2 are (Cout,) vectors.
    batch_grid: number of grid steps the batch is split into (1 for v5e/v6e,
    2 on v7x so each TensorCore takes half the batch).
    """
    N, cin, H, W = x_nchw.shape
    assert cin == CIN
    G = batch_grid
    assert N % G == 0, (N, G)
    NB = N // G

    # stride=2 AND dilation=2 => every tap reads input index 2*(oh+kh):
    # exactly a stride-1/dilation-1 valid conv over the even-phase input.
    x_even = x_nchw[:, :, ::2, ::2]                       # (N, CIN, He, We)
    He, We = x_even.shape[2], x_even.shape[3]
    OH1, OW1 = He - KH1 + 1, We - KW1 + 1
    OH2, OW2 = OH1 - KH2 + 1, OW1 - KW2 + 1
    # sanity: matches the torch output-size formula for conv1
    assert OH1 == (H - DIL1 * (KH1 - 1) - 1) // STRIDE1 + 1
    assert OW1 == (W - DIL1 * (KW1 - 1) - 1) // STRIDE1 + 1

    K1 = KH1 * We * CIN
    K2 = KH2 * OW1 * C1

    # Row-flattened NHWC even-phase input, then im2row over the KH1 height taps
    # (wrapper-side, fused by XLA) so conv1 is a single matmul with K = K1.
    x_rows = jnp.transpose(x_even, (0, 2, 3, 1)).reshape(N, He, We * CIN)
    lhs1 = jnp.concatenate([x_rows[:, kh:kh + OH1, :] for kh in range(KH1)],
                           axis=-1)                        # (N, OH1, K1)
    lhs1 = lhs1.reshape(G, NB * OH1, K1).astype(jnp.bfloat16)

    w1l = _make_lowered_weight(w1, We, OW1).astype(jnp.bfloat16)   # (K1, OW1*C1)
    w2l = _make_lowered_weight(w2, OW1, OW2).astype(jnp.bfloat16)  # (K2, OW2*C2)
    b1f = jnp.tile(b1.reshape(-1), OW1).reshape(1, OW1 * C1)       # f32 epilogue
    b2f = jnp.tile(b2.reshape(-1), OW2).reshape(1, OW2 * C2)

    # TODO(synk): the lowered (Toeplitz) weights grow ~quadratically with the
    # input width; before using large W, tile OW1/OW2 along lanes (banded
    # weight slices) or this exceeds v7x's 64 MiB VMEM.
    assert (w1l.size + w2l.size) * 2 < 32 * 1024 * 1024, \
        "input width too large for un-tiled lowered conv weights"

    kernel = _make_kernel(NB, OH1, OH2, KH2)
    out_rows = pl.pallas_call(
        kernel,
        out_shape=jax.ShapeDtypeStruct((G, NB * OH2, OW2 * C2), jnp.float32),
        grid=(G,),
        in_specs=[
            pl.BlockSpec((1, NB * OH1, K1), lambda g: (g, 0, 0)),
            # Weights/biases: constant index_map, fetched once.  (Could add
            # pipeline_mode=pl.Buffered(1); at these sizes the double-buffer
            # waste is a few hundred KiB, negligible.)
            pl.BlockSpec((K1, OW1 * C1), lambda g: (0, 0)),
            pl.BlockSpec((1, OW1 * C1), lambda g: (0, 0)),
            pl.BlockSpec((K2, OW2 * C2), lambda g: (0, 0)),
            pl.BlockSpec((1, OW2 * C2), lambda g: (0, 0)),
        ],
        out_specs=pl.BlockSpec((1, NB * OH2, OW2 * C2), lambda g: (g, 0, 0)),
        compiler_params=pltpu.CompilerParams(
            # batch-group axis is independent -> v7x megacore split when G>1;
            # with the default G=1 there is a single step (no serial loop).
            dimension_semantics=("parallel",)),
    )(lhs1, w1l, b1f, w2l, b2f)

    # (G, NB*OH2, OW2*C2) -> NCHW (N, C2, OH2, OW2) (layout plumbing in wrapper)
    out = out_rows.reshape(N, OH2, OW2, C2)
    return jnp.transpose(out, (0, 3, 1, 2))


def _reference_forward(x_nchw, w1, b1, w2, b2):
    """Pure-JAX f32 reference using lax.conv_general_dilated (torch semantics)."""
    x = jnp.transpose(x_nchw, (0, 2, 3, 1))
    dn = ("NHWC", "HWIO", "NHWC")
    y = jax.lax.conv_general_dilated(x, w1, window_strides=(2, 2),
                                     padding="VALID", rhs_dilation=(2, 2),
                                     dimension_numbers=dn,
                                     precision=jax.lax.Precision.HIGHEST)
    y = jnp.maximum(y + b1.reshape(1, 1, 1, -1), 0.0)
    y = jax.lax.conv_general_dilated(y, w2, window_strides=(1, 1),
                                     padding="VALID", dimension_numbers=dn,
                                     precision=jax.lax.Precision.HIGHEST)
    y = jnp.maximum(y + b2.reshape(1, 1, 1, -1), 0.0)
    return jnp.transpose(y, (0, 3, 1, 2))


if __name__ == "__main__":
    key = jax.random.PRNGKey(0)
    k1, k2, k3, k4, k5 = jax.random.split(key, 5)

    # Small shapes consistent with the module (channels fixed by the convs).
    N, Hin, Win = 2, 32, 32
    x_nchw = jax.random.normal(k1, (N, CIN, Hin, Win), dtype=jnp.float32)

    # Deterministic PyTorch-style uniform(-1/sqrt(fan_in), +) init, HWIO layout.
    fan1 = CIN * KH1 * KW1
    bnd1 = 1.0 / math.sqrt(fan1)
    w1 = jax.random.uniform(k2, (KH1, KW1, CIN, C1), jnp.float32, -bnd1, bnd1)
    b1 = jax.random.uniform(k3, (C1,), jnp.float32, -bnd1, bnd1)
    fan2 = C1 * KH2 * KW2
    bnd2 = 1.0 / math.sqrt(fan2)
    w2 = jax.random.uniform(k4, (KH2, KW2, C1, C2), jnp.float32, -bnd2, bnd2)
    b2 = jax.random.uniform(k5, (C2,), jnp.float32, -bnd2, bnd2)

    ref = jax.block_until_ready(_reference_forward(x_nchw, w1, b1, w2, b2))

    # Default: single grid step, all batch stacked along M (v5e/v6e best case).
    out = jax.block_until_ready(model_forward(x_nchw, w1, b1, w2, b2))
    assert out.shape == (N, C2, 6, 6), out.shape
    # bf16 matmul operands (f32 accumulation) -> tolerance vs the f32 reference.
    assert jnp.allclose(out, ref, atol=2e-2, rtol=2e-2), float(
        jnp.max(jnp.abs(out - ref)))

    # v7x-style configuration: grid=(2,) "parallel", one batch element per core.
    out2 = jax.block_until_ready(
        model_forward(x_nchw, w1, b1, w2, b2, batch_grid=2))
    assert out2.shape == (N, C2, 6, 6), out2.shape
    assert jnp.allclose(out2, ref, atol=2e-2, rtol=2e-2), float(
        jnp.max(jnp.abs(out2 - ref)))

    print("KERNEL_OK")
</pallas_src>

<mosaic_0001>
module attributes {stable_mosaic.version = 11 : i64} {
  func.func @kernel(%arg0: i32, %arg1: memref<1x20x336xbf16, #tpu.memory_space<vmem>>, %arg2: memref<336x160xbf16, #tpu.memory_space<vmem>>, %arg3: memref<1x160xf32, #tpu.memory_space<vmem>>, %arg4: memref<800x24xbf16, #tpu.memory_space<vmem>>, %arg5: memref<1x24xf32, #tpu.memory_space<vmem>>, %arg6: memref<1x12x24xf32, #tpu.memory_space<vmem>>) attributes {dimension_semantics = [#tpu.dimension_semantics<parallel>], iteration_bounds = array<i64: 1>, scalar_prefetch = 0 : i64, scratch_operands = 0 : i64, tpu.core_type = #tpu.core_type<tc>, window_params = [{transform_indices = @transform_0, window_bounds = array<i64: 1, 20, 336>}, {pipeline_mode = #tpu.pipeline_mode<synchronous>, transform_indices = @transform_1, window_bounds = array<i64: 336, 160>}, {pipeline_mode = #tpu.pipeline_mode<synchronous>, transform_indices = @transform_2, window_bounds = array<i64: 1, 160>}, {pipeline_mode = #tpu.pipeline_mode<synchronous>, transform_indices = @transform_3, window_bounds = array<i64: 800, 24>}, {pipeline_mode = #tpu.pipeline_mode<synchronous>, transform_indices = @transform_4, window_bounds = array<i64: 1, 24>}, {transform_indices = @transform_5, window_bounds = array<i64: 1, 12, 24>}]} {
    %c0 = arith.constant 0 : index
    %c0_0 = arith.constant 0 : index
    %c0_1 = arith.constant 0 : index
    %0 = vector.load %arg1[%c0, %c0_0, %c0_1] : memref<1x20x336xbf16, #tpu.memory_space<vmem>>, vector<1x20x336xbf16>
    %1 = vector.shape_cast %0 : vector<1x20x336xbf16> to vector<20x336xbf16>
    %c0_2 = arith.constant 0 : index
    %c0_3 = arith.constant 0 : index
    %2 = vector.load %arg2[%c0_2, %c0_3] : memref<336x160xbf16, #tpu.memory_space<vmem>>, vector<336x160xbf16>
    %cst = arith.constant dense<0.000000e+00> : vector<20x160xf32>
    %3 = tpu.matmul %1, %2, %cst {dimension_numbers = #tpu.dot_dimension_numbers<[1], [0], [0], [1], [0, 0, 1, 1], [], []>} : vector<20x336xbf16>, vector<336x160xbf16>, vector<20x160xf32> -> vector<20x160xf32>
    %c0_4 = arith.constant 0 : index
    %c0_5 = arith.constant 0 : index
    %4 = vector.load %arg3[%c0_4, %c0_5] : memref<1x160xf32, #tpu.memory_space<vmem>>, vector<1x160xf32>
    %5 = vector.broadcast %4 : vector<1x160xf32> to vector<20x160xf32>
    %6 = arith.addf %3, %5 : vector<20x160xf32>
    %cst_6 = arith.constant 0.000000e+00 : f32
    %7 = vector.broadcast %cst_6 : f32 to vector<20x160xf32>
    %8 = arith.maximumf %6, %7 : vector<20x160xf32>
    %9 = vector.extract_strided_slice %8 {offsets = [0, 0], sizes = [6, 160], strides = [1, 1]} : vector<20x160xf32> to vector<6x160xf32>
    %10 = vector.extract_strided_slice %8 {offsets = [1, 0], sizes = [6, 160], strides = [1, 1]} : vector<20x160xf32> to vector<6x160xf32>
    %11 = vector.extract_strided_slice %8 {offsets = [2, 0], sizes = [6, 160], strides = [1, 1]} : vector<20x160xf32> to vector<6x160xf32>
    %12 = vector.extract_strided_slice %8 {offsets = [3, 0], sizes = [6, 160], strides = [1, 1]} : vector<20x160xf32> to vector<6x160xf32>
    %13 = vector.extract_strided_slice %8 {offsets = [4, 0], sizes = [6, 160], strides = [1, 1]} : vector<20x160xf32> to vector<6x160xf32>
    %14 = tpu.concatenate %9, %10, %11, %12, %13 in 1 : vector<6x160xf32>, vector<6x160xf32>, vector<6x160xf32>, vector<6x160xf32>, vector<6x160xf32> -> vector<6x800xf32>
    %15 = vector.extract_strided_slice %8 {offsets = [10, 0], sizes = [6, 160], strides = [1, 1]} : vector<20x160xf32> to vector<6x160xf32>
    %16 = vector.extract_strided_slice %8 {offsets = [11, 0], sizes = [6, 160], strides = [1, 1]} : vector<20x160xf32> to vector<6x160xf32>
    %17 = vector.extract_strided_slice %8 {offsets = [12, 0], sizes = [6, 160], strides = [1, 1]} : vector<20x160xf32> to vector<6x160xf32>
    %18 = vector.extract_strided_slice %8 {offsets = [13, 0], sizes = [6, 160], strides = [1, 1]} : vector<20x160xf32> to vector<6x160xf32>
    %19 = vector.extract_strided_slice %8 {offsets = [14, 0], sizes = [6, 160], strides = [1, 1]} : vector<20x160xf32> to vector<6x160xf32>
    %20 = tpu.concatenate %15, %16, %17, %18, %19 in 1 : vector<6x160xf32>, vector<6x160xf32>, vector<6x160xf32>, vector<6x160xf32>, vector<6x160xf32> -> vector<6x800xf32>
    %21 = tpu.concatenate %14, %20 in 0 : vector<6x800xf32>, vector<6x800xf32> -> vector<12x800xf32>
    %22 = arith.truncf %21 : vector<12x800xf32> to vector<12x800xbf16>
    %c0_7 = arith.constant 0 : index
    %c0_8 = arith.constant 0 : index
    %23 = vector.load %arg4[%c0_7, %c0_8] : memref<800x24xbf16, #tpu.memory_space<vmem>>, vector<800x24xbf16>
    %cst_9 = arith.constant dense<0.000000e+00> : vector<12x24xf32>
    %24 = tpu.matmul %22, %23, %cst_9 {dimension_numbers = #tpu.dot_dimension_numbers<[1], [0], [0], [1], [0, 0, 1, 1], [], []>} : vector<12x800xbf16>, vector<800x24xbf16>, vector<12x24xf32> -> vector<12x24xf32>
    %c0_10 = arith.constant 0 : index
    %c0_11 = arith.constant 0 : index
    %25 = vector.load %arg5[%c0_10, %c0_11] : memref<1x24xf32, #tpu.memory_space<vmem>>, vector<1x24xf32>
    %26 = vector.broadcast %25 : vector<1x24xf32> to vector<12x24xf32>
    %27 = arith.addf %24, %26 : vector<12x24xf32>
    %cst_12 = arith.constant 0.000000e+00 : f32
    %28 = vector.broadcast %cst_12 : f32 to vector<12x24xf32>
    %29 = arith.maximumf %27, %28 : vector<12x24xf32>
    %c0_13 = arith.constant 0 : index
    %c0_14 = arith.constant 0 : index
    %c0_15 = arith.constant 0 : index
    %30 = vector.load %arg6[%c0_13, %c0_14, %c0_15] : memref<1x12x24xf32, #tpu.memory_space<vmem>>, vector<1x12x24xf32>
    %31 = vector.shape_cast %30 : vector<1x12x24xf32> to vector<12x24xf32>
    %32 = vector.shape_cast %29 : vector<12x24xf32> to vector<1x12x24xf32>
    tpu.vector_store %arg6[%c0_13, %c0_14, %c0_15], %32 {strides = array<i32>} : memref<1x12x24xf32, #tpu.memory_space<vmem>>, vector<1x12x24xf32>,
    return
  }
  func.func @transform_0(%arg0: i32) -> (i32, i32, i32) {
    %c0_i32 = arith.constant 0 : i32
    %c0_i32_0 = arith.constant 0 : i32
    %c0_i32_1 = arith.constant 0 : i32
    return %arg0, %c0_i32, %c0_i32_0 : i32, i32, i32
  }
  func.func @transform_1(%arg0: i32) -> (i32, i32) {
    %c0_i32 = arith.constant 0 : i32
    %c0_i32_0 = arith.constant 0 : i32
    %c0_i32_1 = arith.constant 0 : i32
    return %c0_i32, %c0_i32_0 : i32, i32
  }
  func.func @transform_2(%arg0: i32) -> (i32, i32) {
    %c0_i32 = arith.constant 0 : i32
    %c0_i32_0 = arith.constant 0 : i32
    %c0_i32_1 = arith.constant 0 : i32
    return %c0_i32, %c0_i32_0 : i32, i32
  }
  func.func @transform_3(%arg0: i32) -> (i32, i32) {
    %c0_i32 = arith.constant 0 : i32
    %c0_i32_0 = arith.constant 0 : i32
    %c0_i32_1 = arith.constant 0 : i32
    return %c0_i32, %c0_i32_0 : i32, i32
  }
  func.func @transform_4(%arg0: i32) -> (i32, i32) {
    %c0_i32 = arith.constant 0 : i32
    %c0_i32_0 = arith.constant 0 : i32
    %c0_i32_1 = arith.constant 0 : i32
    return %c0_i32, %c0_i32_0 : i32, i32
  }
  func.func @transform_5(%arg0: i32) -> (i32, i32, i32) {
    %c0_i32 = arith.constant 0 : i32
    %c0_i32_0 = arith.constant 0 : i32
    %c0_i32_1 = arith.constant 0 : i32
    return %arg0, %c0_i32, %c0_i32_0 : i32, i32, i32
  }
}

</mosaic_0001>

<llo_original>
// kernel: tile.13
$region0: #{tile.13}
  #allocation0 [shape = 's32[1]{0}', space=sflag, size = 0x4, scoped, tag = 'scoped memory for tile.13']
  %s0 = inlined_call_operand.vmem [shape: f32[16], index: 0, kind: input, shape index: {}]
  %s1 = inlined_call_operand.vmem [shape: f32[10,16], index: 1, kind: output, shape index: {}]
  // Predicated region
  $region2: #{tile.13} parent=0 // pred_check
    _
  $region3: #{tile.13} parent=0 // pred_check_branch
    %3 = sbr.rel (0) target = $region5
  $region4: #{tile.13} parent=0 // pred_region
    _
  $region5: #{tile.13} parent=0 // pred_fallthru
    _
  %v4 = vld [vmem:[%s0] ss:$0 sm:$0xff]
  %5 = vst [vmem:[%s1] sm:$0xff] %v4
  %s6 = scalar_lea.vmem %s1, 8
  %7 = vst [vmem:[%s6] sm:$0xff] %v4

// kernel: tile.14
$region0: #{tile.14}
  %s0 = inlined_call_operand.vmem [shape: f32[10,16], index: 0, kind: input, shape index: {}]
  %s1 = inlined_call_operand.vmem [shape: f32[1,160], index: 1, kind: output, shape index: {}]
  $region1: #{tile.14} parent=0
    #allocation0 [shape = 'u8[8192]{0}', space=vmem, size = 0x2000, scoped, tag = 'scoped mem for output reshape']
    %s2 = smov 3
    %v3 = vld [vmem:[%s0] ss:$8 sm:%s2]
    %vm4 = vcmask 130048
    %5 = vst.msk [vmem:[#allocation0] ss:$8 sm:$0x3] %vm4, %v3
    %s6 = scalar_lea.vmem %s0, 7
    %v7 = vld [vmem:[%s6] sm:$0x1]
    %8 = vrot.lane.b32.xlu0 %v7, 112
    %v9 = vpop.permute.xlu0 %8
    %vm10 = vcmask 1048448
    %11 = vst.msk [vmem:[#allocation0] sm:$0x1] %vm10, %v9
    %s12 = scalar_lea.vmem %s0, 6
    %v13 = vld [vmem:[%s12] sm:$0x1]
    %14 = vrot.lane.b32.xlu0 %v13, 96
    %v15 = vpop.permute.xlu0 %14
    %vm16 = vcmask 917248
    %17 = vst.msk [vmem:[#allocation0] sm:$0x1] %vm16, %v15
    %s18 = scalar_lea.vmem %s0, 5
    %v19 = vld [vmem:[%s18] sm:$0x1]
    %20 = vrot.lane.b32.xlu0 %v19, 80
    %v21 = vpop.permute.xlu0 %20
    %vm22 = vcmask 786048
    %23 = vst.msk [vmem:[#allocation0] sm:$0x1] %vm22, %v21
    %s24 = scalar_lea.vmem %s0, 4
    %v25 = vld [vmem:[%s24] sm:$0x1]
    %26 = vrot.lane.b32.xlu0 %v25, 64
    %v27 = vpop.permute.xlu0 %26
    %vm28 = vcmask 654848
    %29 = vst.msk [vmem:[#allocation0] sm:$0x1] %vm28, %v27
    %s30 = scalar_lea.vmem %s0, 3
    %v31 = vld [vmem:[%s30] sm:$0x1]
    %32 = vrot.lane.b32.xlu0 %v31, 48
    %v33 = vpop.permute.xlu0 %32
    %vm34 = vcmask 523648
    %35 = vst.msk [vmem:[#allocation0] sm:$0x1] %vm34, %v33
    %s36 = scalar_lea.vmem %s0, 2
    %v37 = vld [vmem:[%s36] sm:$0x1]
    %38 = vrot.lane.b32.xlu0 %v37, 32
    %v39 = vpop.permute.xlu0 %38
    %vm40 = vcmask 392448
    %41 = vst.msk [vmem:[#allocation0] sm:$0x1] %vm40, %v39
    %s42 = scalar_lea.vmem %s0, 1
    %s43 = smov 3
    %v44 = vld [vmem:[%s42] ss:$8 sm:%s43]
    %45 = vrot.lane.b32.xlu0 %v44, 16
    %v46 = vpop.permute.xlu0 %45
    %vm47 = vcmask 261248
    %48 = vst.msk [vmem:[#allocation0] ss:$8 sm:$0x3] %vm47, %v46
    %s50 = sshllo.u32 0, 1
    %v52 = vld [vmem:[#allocation0] sm:%s50]
    %s53 = sshllo.u32 0, 1
    %54 = vst [vmem:[%s1] sm:%s53] %v52
    %s55 = scalar_lea.vmem [#allocation0], 8
    %v56 = vld [vmem:[%s55] sm:%s50]
    %s57 = sshllo.u32 0, 1
    %s58 = scalar_lea.vmem %s1, 1
    %59 = vst [vmem:[%s58] sm:%s57] %v56

// kernel: tile.18
$region0: #{tile.18}
  #allocation0 [shape = 's32[1]{0}', space=sflag, size = 0x4, scoped, tag = 'scoped memory for tile.18']
  %s0 = inlined_call_operand.vmem [shape: f32[4], index: 0, kind: input, shape index: {}]
  %s1 = inlined_call_operand.vmem [shape: f32[6,4], index: 1, kind: output, shape index: {}]
  // Predicated region
  $region2: #{tile.18} parent=0 // pred_check
    _
  $region3: #{tile.18} parent=0 // pred_check_branch
    %3 = sbr.rel (0) target = $region5
  $region4: #{tile.18} parent=0 // pred_region
    _
  $region5: #{tile.18} parent=0 // pred_fallthru
    _
  %v4 = vld [vmem:[%s0] ss:$0 sm:$0xff]
  %5 = vst [vmem:[%s1] sm:$0xff] %v4

// kernel: tile.19
$region0: #{tile.19}
  %s0 = inlined_call_operand.vmem [shape: f32[6,4], index: 0, kind: input, shape index: {}]
  %s1 = inlined_call_operand.vmem [shape: f32[1,24], index: 1, kind: output, shape index: {}]
  $region1: #{tile.19} parent=0
    #allocation0 [shape = 'u8[4096]{0}', space=vmem, size = 0x1000, scoped, tag = 'scoped mem for output reshape']
    %v2 = vld [vmem:[%s0] sm:$0x1]
    %vm3 = vcmask 31744
    %4 = vst.msk [vmem:[#allocation0] sm:$0x1] %vm3, %v2
    %s5 = scalar_lea.vmem %s0, 5
    %v6 = vld [vmem:[%s5] sm:$0x1]
    %7 = vrot.lane.b32.xlu0 %v6, 20
    %v8 = vpop.permute.xlu0 %7
    %vm9 = vcmask 195744
    %10 = vst.msk [vmem:[#allocation0] sm:$0x1] %vm9, %v8
    %s11 = scalar_lea.vmem %s0, 4
    %v12 = vld [vmem:[%s11] sm:$0x1]
    %13 = vrot.lane.b32.xlu0 %v12, 16
    %v14 = vpop.permute.xlu0 %13
    %vm15 = vcmask 162944
    %16 = vst.msk [vmem:[#allocation0] sm:$0x1] %vm15, %v14
    %s17 = scalar_lea.vmem %s0, 3
    %v18 = vld [vmem:[%s17] sm:$0x1]
    %19 = vrot.lane.b32.xlu0 %v18, 12
    %v20 = vpop.permute.xlu0 %19
    %vm21 = vcmask 130144
    %22 = vst.msk [vmem:[#allocation0] sm:$0x1] %vm21, %v20
    %s23 = scalar_lea.vmem %s0, 2
    %v24 = vld [vmem:[%s23] sm:$0x1]
    %25 = vrot.lane.b32.xlu0 %v24, 8
    %v26 = vpop.permute.xlu0 %25
    %vm27 = vcmask 97344
    %28 = vst.msk [vmem:[#allocation0] sm:$0x1] %vm27, %v26
    %s29 = scalar_lea.vmem %s0, 1
    %v30 = vld [vmem:[%s29] sm:$0x1]
    %31 = vrot.lane.b32.xlu0 %v30, 4
    %v32 = vpop.permute.xlu0 %31
    %vm33 = vcmask 64544
    %34 = vst.msk [vmem:[#allocation0] sm:$0x1] %vm33, %v32
    %s36 = sshllo.u32 0, 1
    %v38 = vld [vmem:[#allocation0] sm:%s36]
    %s39 = sshllo.u32 0, 1
    %40 = vst [vmem:[%s1] sm:%s39] %v38

// kernel: model_forward.1
$region0: #{model_forward.1}
  #allocation0 [shape = 'u32[]', space=smem, size = 0x4, offset = 0x4, fixed_abs, tag = 'smem constant byte address 0x4 - core index']
  #allocation1 [shape = 'u32[144,128]{1,0:T(1,128)}', space=vmem, size = 0x12000, scoped, tag = 'internal scratch']
  %s0 = inlined_call_operand.vmem [shape: bf16[1,20,336], index: 0, kind: input, shape index: {}]
  %s1 = inlined_call_operand.vmem [shape: bf16[336,160], index: 1, kind: input, shape index: {}]
  %s2 = inlined_call_operand.vmem [shape: f32[1,160], index: 2, kind: input, shape index: {}]
  %s3 = inlined_call_operand.vmem [shape: bf16[800,24], index: 3, kind: input, shape index: {}]
  %s4 = inlined_call_operand.vmem [shape: f32[1,24], index: 4, kind: input, shape index: {}]
  %s5 = inlined_call_operand.vmem [shape: f32[1,12,24], index: 5, kind: output, shape index: {}]
  %s6 = sld [smem:[#allocation0]]
  $region30: #{model_forward.1} parent=0
    _
  %s8 = ssub.s32 1, %s6
  %s9 = scalar_select 0, %s8, %s6
  // Predicated region
  $region2: #{model_forward.1} parent=0 // pred_check
    _
  $region3: #{model_forward.1} parent=0 // pred_check_branch
    %11 = sbr.rel (0) target = $region5
  $region4: #{model_forward.1} parent=0 // pred_region
    _
  $region5: #{model_forward.1} parent=0 // pred_fallthru
    _
  // Predicated region
  $region6: #{model_forward.1} parent=0 // pred_check
    _
  $region7: #{model_forward.1} parent=0 // pred_check_branch
    %13 = sbr.rel (0) target = $region9
  $region8: #{model_forward.1} parent=0 // pred_region
    _
  $region9: #{model_forward.1} parent=0 // pred_fallthru
    _
  // Predicated region
  $region10: #{model_forward.1} parent=0 // pred_check
    _
  $region11: #{model_forward.1} parent=0 // pred_check_branch
    %15 = sbr.rel (0) target = $region13
  $region12: #{model_forward.1} parent=0 // pred_region
    _
  $region13: #{model_forward.1} parent=0 // pred_fallthru
    _
  // Predicated region
  $region14: #{model_forward.1} parent=0 // pred_check
    _
  $region15: #{model_forward.1} parent=0 // pred_check_branch
    %17 = sbr.rel (0) target = $region17
  $region16: #{model_forward.1} parent=0 // pred_region
    _
  $region17: #{model_forward.1} parent=0 // pred_fallthru
    _
  // Predicated region
  $region18: #{model_forward.1} parent=0 // pred_check
    _
  $region19: #{model_forward.1} parent=0 // pred_check_branch
    %19 = sbr.rel (0) target = $region21
  $region20: #{model_forward.1} parent=0 // pred_region
    _
  $region21: #{model_forward.1} parent=0 // pred_fallthru
    _
  %v21 = vld [vmem:[%s0] sm:$0xff]
  %v22 = vld [vmem:[%s0 + $0x8] sm:$0xf]
  %v23 = vld [vmem:[%s0 + $0xc] sm:$0xff]
  %v24 = vld [vmem:[%s0 + $0x14] sm:$0xf]
  %v25 = vld [vmem:[%s0 + $0x18] sm:$0x33]
  %v26 = vld [vmem:[%s0 + $0x20] sm:$0x3]
  %v27 = vld [vmem:[%s1] sm:$0xff]
  %v28 = vld [vmem:[%s1 + $0x8] sm:$0xff]
  %v29 = vld [vmem:[%s1 + $0x10] sm:$0xff]
  %v30 = vld [vmem:[%s1 + $0x18] sm:$0xff]
  %v31 = vld [vmem:[%s1 + $0x20] sm:$0xff]
  %v32 = vld [vmem:[%s1 + $0x28] sm:$0xff]
  %v33 = vld [vmem:[%s1 + $0x30] sm:$0xff]
  %v34 = vld [vmem:[%s1 + $0x38] sm:$0xff]
  %v35 = vld [vmem:[%s1 + $0x40] sm:$0xff]
  %v36 = vld [vmem:[%s1 + $0x48] sm:$0xff]
  %v37 = vld [vmem:[%s1 + $0x50] sm:$0xff]
  %v38 = vld [vmem:[%s1 + $0x58] sm:$0xff]
  %v39 = vld [vmem:[%s1 + $0x60] sm:$0xff]
  %v40 = vld [vmem:[%s1 + $0x68] sm:$0xff]
  %v41 = vld [vmem:[%s1 + $0x70] sm:$0xff]
  %v42 = vld [vmem:[%s1 + $0x78] sm:$0xff]
  %v43 = vld [vmem:[%s1 + $0x80] sm:$0xff]
  %v44 = vld [vmem:[%s1 + $0x88] sm:$0xff]
  %v45 = vld [vmem:[%s1 + $0x90] sm:$0xff]
  %v46 = vld [vmem:[%s1 + $0x98] sm:$0xff]
  %v47 = vld [vmem:[%s1 + $0xa0] sm:$0xff]
  %v48 = vld [vmem:[%s1 + $0xa8] sm:$0xff]
  %v49 = vld [vmem:[%s1 + $0xb0] sm:$0xff]
  %v50 = vld [vmem:[%s1 + $0xb8] sm:$0xff]
  %v51 = vld [vmem:[%s1 + $0xc0] sm:$0xff]
  %v52 = vld [vmem:[%s1 + $0xc8] sm:$0xff]
  %v53 = vld [vmem:[%s1 + $0xd0] sm:$0xff]
  %v54 = vld [vmem:[%s1 + $0xd8] sm:$0xff]
  %v55 = vld [vmem:[%s1 + $0xe0] sm:$0xff]
  %v56 = vld [vmem:[%s1 + $0xe8] sm:$0xff]
  %v57 = vld [vmem:[%s1 + $0xf0] sm:$0xff]
  %v58 = vld [vmem:[%s1 + $0xf8] sm:$0xff]
  %v59 = vld [vmem:[%s1 + $0x100] sm:$0xff]
  %v60 = vld [vmem:[%s1 + $0x108] sm:$0xff]
  %v61 = vld [vmem:[%s1 + $0x110] sm:$0xff]
  %v62 = vld [vmem:[%s1 + $0x118] sm:$0xff]
  %v63 = vld [vmem:[%s1 + $0x120] sm:$0xff]
  %v64 = vld [vmem:[%s1 + $0x128] sm:$0xff]
  %v65 = vld [vmem:[%s1 + $0x130] sm:$0xff]
  %v66 = vld [vmem:[%s1 + $0x138] sm:$0xff]
  %v67 = vld [vmem:[%s1 + $0x140] sm:$0xff]
  %v68 = vld [vmem:[%s1 + $0x148] sm:$0xff]
  %v69 = vld [vmem:[%s2] sm:$0x3]
  %v71 = vlaneseq
  %v72 = vshrl.u32 %v71, 7
  %v73 = vsub.s32 0, %v72
  %v74 = vrot.slane %v69, %v73
  %v75 = vlaneseq
  %v76 = vshrl.u32 %v75, 7
  %v77 = vsub.s32 1, %v76
  %v78 = vrot.slane %v69, %v77
  %v87 = vunpack.c.l.b16 %v21
  %v88 = vunpack.c.h.b16 %v21
  %v89 = vunpack.c.l.b16 %v22
  %v90 = vunpack.c.l.b16 %v23
  %v91 = vunpack.c.h.b16 %v23
  %v92 = vunpack.c.l.b16 %v24
  %v93 = vunpack.c.l.b16 %v25
  %v94 = vunpack.c.h.b16 %v25
  %v95 = vunpack.c.l.b16 %v26
  %v96 = vpack.c.b16 %v90, %v87
  %v97 = vpack.c.b16 %v91, %v88
  %v98 = vpack.c.b16 %v92, %v89
  %v99 = vpack.c.b16 %v93, %v93
  %v100 = vpack.c.b16 %v94, %v94
  %v101 = vpack.c.b16 %v95, %v95
  %v148 = vunpack.c.l.b16 %v27
  %v149 = vunpack.c.h.b16 %v27
  %v150 = vunpack.c.l.b16 %v28
  %v151 = vunpack.c.h.b16 %v28
  %v152 = vunpack.c.l.b16 %v29
  %v153 = vunpack.c.h.b16 %v29
  %v154 = vunpack.c.l.b16 %v30
  %v155 = vunpack.c.h.b16 %v30
  %v156 = vunpack.c.l.b16 %v31
  %v157 = vunpack.c.h.b16 %v31
  %v158 = vunpack.c.l.b16 %v32
  %v159 = vunpack.c.h.b16 %v32
  %v160 = vunpack.c.l.b16 %v33
  %v161 = vunpack.c.h.b16 %v33
  %v162 = vunpack.c.l.b16 %v34
  %v163 = vunpack.c.h.b16 %v34
  %v164 = vunpack.c.l.b16 %v35
  %v165 = vunpack.c.h.b16 %v35
  %v166 = vunpack.c.l.b16 %v36
  %v167 = vunpack.c.h.b16 %v36
  %v168 = vunpack.c.l.b16 %v37
  %v169 = vunpack.c.h.b16 %v37
  %v170 = vunpack.c.l.b16 %v38
  %v171 = vunpack.c.h.b16 %v38
  %v172 = vunpack.c.l.b16 %v39
  %v173 = vunpack.c.h.b16 %v39
  %v174 = vunpack.c.l.b16 %v40
  %v175 = vunpack.c.h.b16 %v40
  %v176 = vunpack.c.l.b16 %v41
  %v177 = vunpack.c.h.b16 %v41
  %v178 = vunpack.c.l.b16 %v42
  %v179 = vunpack.c.h.b16 %v42
  %v180 = vunpack.c.l.b16 %v43
  %v181 = vunpack.c.h.b16 %v43
  %v182 = vunpack.c.l.b16 %v44
  %v183 = vunpack.c.h.b16 %v44
  %v184 = vunpack.c.l.b16 %v45
  %v185 = vunpack.c.h.b16 %v45
  %v186 = vunpack.c.l.b16 %v46
  %v187 = vunpack.c.h.b16 %v46
  %v188 = vunpack.c.l.b16 %v47
  %v189 = vunpack.c.h.b16 %v47
  %v190 = vunpack.c.l.b16 %v48
  %v191 = vunpack.c.h.b16 %v48
  %v192 = vunpack.c.l.b16 %v49
  %v193 = vunpack.c.h.b16 %v49
  %v194 = vunpack.c.l.b16 %v50
  %v195 = vunpack.c.h.b16 %v50
  %v196 = vunpack.c.l.b16 %v51
  %v197 = vunpack.c.h.b16 %v51
  %v198 = vunpack.c.l.b16 %v52
  %v199 = vunpack.c.h.b16 %v52
  %v200 = vunpack.c.l.b16 %v53
  %v201 = vunpack.c.h.b16 %v53
  %v202 = vunpack.c.l.b16 %v54
  %v203 = vunpack.c.h.b16 %v54
  %v204 = vunpack.c.l.b16 %v55
  %v205 = vunpack.c.h.b16 %v55
  %v206 = vunpack.c.l.b16 %v56
  %v207 = vunpack.c.h.b16 %v56
  %v208 = vunpack.c.l.b16 %v57
  %v209 = vunpack.c.h.b16 %v57
  %v210 = vunpack.c.l.b16 %v58
  %v211 = vunpack.c.h.b16 %v58
  %v212 = vunpack.c.l.b16 %v59
  %v213 = vunpack.c.h.b16 %v59
  %v214 = vunpack.c.l.b16 %v60
  %v215 = vunpack.c.h.b16 %v60
  %v216 = vunpack.c.l.b16 %v61
  %v217 = vunpack.c.h.b16 %v61
  %v218 = vunpack.c.l.b16 %v62
  %v219 = vunpack.c.h.b16 %v62
  %v220 = vunpack.c.l.b16 %v63
  %v221 = vunpack.c.h.b16 %v63
  %v222 = vunpack.c.l.b16 %v64
  %v223 = vunpack.c.h.b16 %v64
  %v224 = vunpack.c.l.b16 %v65
  %v225 = vunpack.c.h.b16 %v65
  %v226 = vunpack.c.l.b16 %v66
  %v227 = vunpack.c.h.b16 %v66
  %v228 = vunpack.c.l.b16 %v67
  %v229 = vunpack.c.h.b16 %v67
  %v230 = vunpack.c.l.b16 %v68
  %v231 = vunpack.c.h.b16 %v68
  %v232 = vpack.c.b16 %v150, %v148
  %v233 = vpack.c.b16 %v151, %v149
  %v234 = vpack.c.b16 %v154, %v152
  %v235 = vpack.c.b16 %v155, %v153
  %v236 = vpack.c.b16 %v158, %v156
  %v237 = vpack.c.b16 %v159, %v157
  %v238 = vpack.c.b16 %v162, %v160
  %v239 = vpack.c.b16 %v163, %v161
  %v240 = vpack.c.b16 %v166, %v164
  %v241 = vpack.c.b16 %v167, %v165
  %v242 = vpack.c.b16 %v170, %v168
  %v243 = vpack.c.b16 %v171, %v169
  %v244 = vpack.c.b16 %v174, %v172
  %v245 = vpack.c.b16 %v175, %v173
  %v246 = vpack.c.b16 %v178, %v176
  %v247 = vpack.c.b16 %v179, %v177
  %v248 = vpack.c.b16 %v182, %v180
  %v249 = vpack.c.b16 %v183, %v181
  %v250 = vpack.c.b16 %v186, %v184
  %v251 = vpack.c.b16 %v187, %v185
  %v252 = vpack.c.b16 %v190, %v188
  %v253 = vpack.c.b16 %v191, %v189
  %v254 = vpack.c.b16 %v194, %v192
  %v255 = vpack.c.b16 %v195, %v193
  %v256 = vpack.c.b16 %v198, %v196
  %v257 = vpack.c.b16 %v199, %v197
  %v258 = vpack.c.b16 %v202, %v200
  %v259 = vpack.c.b16 %v203, %v201
  %v260 = vpack.c.b16 %v206, %v204
  %v261 = vpack.c.b16 %v207, %v205
  %v262 = vpack.c.b16 %v210, %v208
  %v263 = vpack.c.b16 %v211, %v209
  %v264 = vpack.c.b16 %v214, %v212
  %v265 = vpack.c.b16 %v215, %v213
  %v266 = vpack.c.b16 %v218, %v216
  %v267 = vpack.c.b16 %v219, %v217
  %v268 = vpack.c.b16 %v222, %v220
  %v269 = vpack.c.b16 %v223, %v221
  %v270 = vpack.c.b16 %v226, %v224
  %v271 = vpack.c.b16 %v227, %v225
  %v272 = vpack.c.b16 %v230, %v228
  %v273 = vpack.c.b16 %v231, %v229
  %vm316 = vcmask 654336
  %v318 = vsel %vm316, %v98, 0
  %v321 = vsel %vm316, %v101, 0
  %323 = vmatprep.subr.bf16.mxu0 %v233
  %324 = vmatpush1.bf16.msra.mxu0 %v232
  %325 = vmatprep.subr.bf16.mxu0 %v235
  %326 = vmatpush1.bf16.msra.mxu0 %v234
  %327 = vmatprep.subr.bf16.mxu0 %v237
  %328 = vmatpush1.bf16.msra.mxu0 %v236
  %329 = vmatprep.subr.bf16.mxu0 %v239
  %330 = vmatpush1.bf16.msra.mxu0 %v238
  %331 = vmatprep.subr.bf16.mxu0 %v241
  %332 = vmatpush1.bf16.msra.mxu0 %v240
  %333 = vmatprep.subr.bf16.mxu0 %v243
  %334 = vmatpush1.bf16.msra.mxu0 %v242
  %335 = vmatprep.subr.bf16.mxu0 %v245
  %336 = vmatpush1.bf16.msra.mxu0 %v244
  %337 = vmatprep.subr.bf16.mxu0 %v247
  %338 = vmatpush1.bf16.msra.mxu0 %v246
  %339 = vmatprep.subr.bf16.mxu0 %v249
  %340 = vmatpush1.bf16.msra.mxu0 %v248
  %341 = vmatprep.subr.bf16.mxu0 %v251
  %342 = vmatpush1.bf16.msra.mxu0 %v250
  %343 = vmatprep.subr.bf16.mxu0 %v253
  %344 = vmatpush1.bf16.msra.mxu0 %v252
  %345 = vmatprep.subr.bf16.mxu0 %v255
  %346 = vmatpush1.bf16.msra.mxu0 %v254
  %347 = vmatprep.subr.bf16.mxu0 %v257
  %348 = vmatpush1.bf16.msra.mxu0 %v256
  %349 = vmatprep.subr.bf16.mxu0 %v259
  %350 = vmatpush1.bf16.msra.mxu0 %v258
  %351 = vmatprep.subr.bf16.mxu0 %v261
  %352 = vmatpush1.bf16.msra.mxu0 %v260
  %353 = vmatprep.subr.bf16.mxu0 %v263
  %354 = vmatpush1.bf16.msra.mxu0 %v262
  %355 = vmatprep.mubr.bf16.mxu0 %v97
  %356 = vmatmul.mubr.bf16.gmra.mrb[0].mxu0 %v96
  %v357 = vpop.f32.mrb[0].mxu0
  %v358 = vadd.f32 %v74, %v357
  %v359 = vpop.f32.mrb[0].mxu0
  %v360 = vadd.f32 %v78, %v359
  %v361 = vpop.f32.mrb[0].mxu0
  %v362 = vadd.f32 %v74, %v361
  %v363 = vpop.f32.mrb[0].mxu0
  %v364 = vadd.f32 %v78, %v363
  %365 = vmatprep.mubr.bf16.mxu0 %v100
  %366 = vmatmul.mubr.bf16.gmra.mrb[0].mxu0 %v99
  %v367 = vpop.f32.mrb[0].mxu0
  %v368 = vadd.f32 %v74, %v367
  %v369 = vpop.f32.mrb[0].mxu0
  %v370 = vadd.f32 %v78, %v369
  %v371 = vpop.f32.mrb[0].mxu0
  %v372 = vpop.f32.mrb[0].mxu0
  %373 = vdwg.mxu0
  %374 = vmatprep.subr.bf16.mxu0 %v265
  %375 = vmatpush1.bf16.msra.mxu0 %v264
  %376 = vmatprep.subr.bf16.mxu0 %v267
  %377 = vmatpush1.bf16.msra.mxu0 %v266
  %378 = vmatprep.subr.bf16.mxu0 %v269
  %379 = vmatpush1.bf16.msra.mxu0 %v268
  %380 = vmatprep.subr.bf16.mxu0 %v271
  %381 = vmatpush1.bf16.msra.mxu0 %v270
  %382 = vmatprep.subr.bf16.mxu0 %v273
  %383 = vmatpush1.bf16.msra.mxu0 %v272
  %384 = vmatprep.subr.bf16.mxu0 0
  %385 = vmatpush1.bf16.msra.mxu0 0
  %386 = vmatprep.subr.bf16.mxu0 0
  %387 = vmatpush1.bf16.msra.mxu0 0
  %388 = vmatprep.subr.bf16.mxu0 0
  %389 = vmatpush1.bf16.msra.mxu0 0
  %390 = vmatprep.subr.bf16.mxu0 0
  %391 = vmatpush1.bf16.msra.mxu0 0
  %392 = vmatprep.subr.bf16.mxu0 0
  %393 = vmatpush1.bf16.msra.mxu0 0
  %394 = vmatprep.subr.bf16.mxu0 0
  %395 = vmatpush1.bf16.msra.mxu0 0
  %396 = vmatprep.subr.bf16.mxu0 0
  %397 = vmatpush1.bf16.msra.mxu0 0
  %398 = vmatprep.subr.bf16.mxu0 0
  %399 = vmatpush1.bf16.msra.mxu0 0
  %400 = vmatprep.subr.bf16.mxu0 0
  %401 = vmatpush1.bf16.msra.mxu0 0
  %402 = vmatprep.subr.bf16.mxu0 0
  %403 = vmatpush1.bf16.msra.mxu0 0
  %404 = vmatprep.subr.bf16.mxu0 0
  %405 = vmatpush1.bf16.msra.mxu0 0
  %406 = vmatprep.mubr.bf16.mxu0 0
  %407 = vmatmul.mubr.bf16.gmra.mrb[0].mxu0 %v318
  %v408 = vpop.f32.mrb[0].mxu0
  %v409 = vadd.f32 %v358, %v408
  %v410 = vpop.f32.mrb[0].mxu0
  %v411 = vadd.f32 %v360, %v410
  %v412 = vpop.f32.mrb[0].mxu0
  %v413 = vadd.f32 %v362, %v412
  %v414 = vpop.f32.mrb[0].mxu0
  %v415 = vadd.f32 %v364, %v414
  %416 = vmatprep.mubr.bf16.mxu0 0
  %417 = vmatmul.mubr.bf16.gmra.mrb[0].mxu0 %v321
  %v418 = vpop.f32.mrb[0].mxu0
  %v419 = vadd.f32 %v368, %v418
  %v420 = vpop.f32.mrb[0].mxu0
  %v421 = vadd.f32 %v370, %v420
  %v422 = vpop.f32.mrb[0].mxu0
  %v423 = vpop.f32.mrb[0].mxu0
  %424 = vdwg.mxu0
  %v425 = vmax.f32 %v409, 0.0
  %v426 = vmax.f32 %v411, 0.0
  %v427 = vmax.f32 %v413, 0.0
  %v428 = vmax.f32 %v415, 0.0
  %v429 = vmax.f32 %v419, 0.0
  %v430 = vmax.f32 %v421, 0.0
  %v433 = vrot.slane %v425, 1
  %v434 = vrot.slane %v426, 1
  %435 = vrot.lane.b32.xlu0 %v433, 32
  %v436 = vpop.permute.xlu0 %435
  %437 = vrot.lane.b32.xlu0 %v434, 32
  %v438 = vpop.permute.xlu0 %437
  %vm439 = vcmask 261120
  %v440 = vsel %vm439, %v436, %v438
  %v443 = vrot.slane %v425, 2
  %v444 = vrot.slane %v426, 2
  %445 = vrot.lane.b32.xlu0 %v443, 64
  %v446 = vpop.permute.xlu0 %445
  %447 = vrot.lane.b32.xlu0 %v444, 64
  %v448 = vpop.permute.xlu0 %447
  %vm449 = vcmask 523264
  %v450 = vsel %vm449, %v446, %v448
  %vm455 = vcmask 1044480
  %v456 = vrot.slane %v425, 3
  %v457 = vrot.slane %v427, 3
  %v458 = vsel %vm455, %v456, %v457
  %v459 = vrot.slane %v426, 3
  %v460 = vrot.slane %v428, 3
  %v461 = vsel %vm455, %v459, %v460
  %462 = vrot.lane.b32.xlu0 %v458, 96
  %v463 = vpop.permute.xlu0 %462
  %464 = vrot.lane.b32.xlu0 %v461, 96
  %v465 = vpop.permute.xlu0 %464
  %vm466 = vcmask 785408
  %v467 = vsel %vm466, %v463, %v465
  %vm470 = vcmask 1043456
  %v471 = vrot.slane %v425, 4
  %v472 = vrot.slane %v427, 4
  %v473 = vsel %vm470, %v471, %v472
  %v474 = vrot.slane %v426, 4
  %v475 = vrot.slane %v428, 4
  %v476 = vsel %vm470, %v474, %v475
  %v479 = vsel %vm439, %v426, %v436
  %v480 = vsel %vm449, %v440, %v446
  %v481 = vsel %vm466, %v450, %v463
  %vm484 = vcmask 1046528
  %v485 = vrot.slane %v427, 1
  %v486 = vrot.slane %v429, 1
  %v487 = vsel %vm484, %v485, %v486
  %v488 = vrot.slane %v428, 1
  %v489 = vrot.slane %v430, 1
  %v490 = vsel %vm484, %v488, %v489
  %491 = vrot.lane.b32.xlu0 %v487, 32
  %v492 = vpop.permute.xlu0 %491
  %493 = vrot.lane.b32.xlu0 %v490, 32
  %v494 = vpop.permute.xlu0 %493
  %v495 = vsel %vm439, %v492, %v494
  %vm498 = vcmask 1045504
  %v499 = vrot.slane %v427, 2
  %v500 = vrot.slane %v429, 2
  %v501 = vsel %vm498, %v499, %v500
  %v502 = vrot.slane %v428, 2
  %v503 = vrot.slane %v430, 2
  %v504 = vsel %vm498, %v502, %v503
  %505 = vrot.lane.b32.xlu0 %v501, 64
  %v506 = vpop.permute.xlu0 %505
  %507 = vrot.lane.b32.xlu0 %v504, 64
  %v508 = vpop.permute.xlu0 %507
  %v509 = vsel %vm449, %v506, %v508
  %v512 = vrot.slane %v429, 3
  %v513 = vsel %vm455, %v457, %v512
  %v514 = vrot.slane %v430, 3
  %v515 = vsel %vm455, %v460, %v514
  %516 = vrot.lane.b32.xlu0 %v513, 96
  %v517 = vpop.permute.xlu0 %516
  %518 = vrot.lane.b32.xlu0 %v515, 96
  %v519 = vpop.permute.xlu0 %518
  %v520 = vsel %vm466, %v517, %v519
  %v522 = vrot.slane %v429, 4
  %v523 = vsel %vm470, %v472, %v522
  %v524 = vrot.slane %v430, 4
  %v525 = vsel %vm470, %v475, %v524
  %v526 = vsel %vm439, %v428, %v492
  %v527 = vsel %vm449, %v495, %v506
  %v528 = vsel %vm466, %v509, %v517
  %v532 = vrot.slane %v526, 4
  %v533 = vrot.slane %v527, 4
  %v534 = vrot.slane %v528, 4
  %v535 = vrot.slane %v520, 4
  %v536 = vrot.slane %v523, 4
  %v537 = vrot.slane %v525, 4
  %v545 = vsel %vm498, %v425, %v472
  %v546 = vsel %vm498, %v479, %v532
  %v547 = vsel %vm498, %v480, %v533
  %v548 = vsel %vm498, %v481, %v534
  %v549 = vsel %vm498, %v467, %v535
  %v550 = vsel %vm498, %v473, %v536
  %v551 = vsel %vm498, %v476, %v537
  %v552 = vpack.c.bf16 %v472, %v545
  %v553 = vpack.c.bf16 %v532, %v546
  %v554 = vpack.c.bf16 %v533, %v547
  %v555 = vpack.c.bf16 %v534, %v548
  %v556 = vpack.c.bf16 %v535, %v549
  %v557 = vpack.c.bf16 %v536, %v550
  %v558 = vpack.c.bf16 %v537, %v551
  %v559 = vld [vmem:[%s3] sm:$0xf]
  %v560 = vld [vmem:[%s3 + $0x4] sm:$0xf]
  %v561 = vld [vmem:[%s3 + $0x8] sm:$0xf]
  %v562 = vld [vmem:[%s3 + $0xc] sm:$0xf]
  %v563 = vld [vmem:[%s3 + $0x10] sm:$0xf]
  %v564 = vld [vmem:[%s3 + $0x14] sm:$0xf]
  %v565 = vld [vmem:[%s3 + $0x18] sm:$0xf]
  %v566 = vld [vmem:[%s3 + $0x1c] sm:$0xf]
  %v567 = vld [vmem:[%s3 + $0x20] sm:$0xf]
  %v568 = vld [vmem:[%s3 + $0x24] sm:$0xf]
  %v569 = vld [vmem:[%s3 + $0x28] sm:$0xf]
  %v570 = vld [vmem:[%s3 + $0x2c] sm:$0xf]
  %v571 = vld [vmem:[%s3 + $0x30] sm:$0xf]
  %v572 = vld [vmem:[%s3 + $0x34] sm:$0xf]
  %v573 = vld [vmem:[%s3 + $0x38] sm:$0xf]
  %v574 = vld [vmem:[%s3 + $0x3c] sm:$0xf]
  %v575 = vld [vmem:[%s3 + $0x40] sm:$0xf]
  %v576 = vld [vmem:[%s3 + $0x44] sm:$0xf]
  %v577 = vld [vmem:[%s3 + $0x48] sm:$0xf]
  %v578 = vld [vmem:[%s3 + $0x4c] sm:$0xf]
  %v579 = vld [vmem:[%s3 + $0x50] sm:$0xf]
  %v580 = vld [vmem:[%s3 + $0x54] sm:$0xf]
  %v581 = vld [vmem:[%s3 + $0x58] sm:$0xf]
  %v582 = vld [vmem:[%s3 + $0x5c] sm:$0xf]
  %v583 = vld [vmem:[%s3 + $0x60] sm:$0xf]
  %v584 = vld [vmem:[%s3 + $0x64] sm:$0xf]
  %v585 = vld [vmem:[%s3 + $0x68] sm:$0xf]
  %v586 = vld [vmem:[%s3 + $0x6c] sm:$0xf]
  %v587 = vld [vmem:[%s3 + $0x70] sm:$0xf]
  %v588 = vld [vmem:[%s3 + $0x74] sm:$0xf]
  %v589 = vld [vmem:[%s3 + $0x78] sm:$0xf]
  %v590 = vld [vmem:[%s3 + $0x7c] sm:$0xf]
  %v591 = vld [vmem:[%s3 + $0x80] sm:$0xf]
  %v592 = vld [vmem:[%s3 + $0x84] sm:$0xf]
  %v593 = vld [vmem:[%s3 + $0x88] sm:$0xf]
  %v594 = vld [vmem:[%s3 + $0x8c] sm:$0xf]
  %v595 = vld [vmem:[%s3 + $0x90] sm:$0xf]
  %v596 = vld [vmem:[%s3 + $0x94] sm:$0xf]
  %v597 = vld [vmem:[%s3 + $0x98] sm:$0xf]
  %v598 = vld [vmem:[%s3 + $0x9c] sm:$0xf]
  %v599 = vld [vmem:[%s3 + $0xa0] sm:$0xf]
  %v600 = vld [vmem:[%s3 + $0xa4] sm:$0xf]
  %v601 = vld [vmem:[%s3 + $0xa8] sm:$0xf]
  %v602 = vld [vmem:[%s3 + $0xac] sm:$0xf]
  %v603 = vld [vmem:[%s3 + $0xb0] sm:$0xf]
  %v604 = vld [vmem:[%s3 + $0xb4] sm:$0xf]
  %v605 = vld [vmem:[%s3 + $0xb8] sm:$0xf]
  %v606 = vld [vmem:[%s3 + $0xbc] sm:$0xf]
  %v607 = vld [vmem:[%s3 + $0xc0] sm:$0xf]
  %v608 = vld [vmem:[%s3 + $0xc4] sm:$0xf]
  %v609 = vld [vmem:[%s3 + $0xc8] sm:$0xf]
  %v610 = vld [vmem:[%s3 + $0xcc] sm:$0xf]
  %v611 = vld [vmem:[%s3 + $0xd0] sm:$0xf]
  %v612 = vld [vmem:[%s3 + $0xd4] sm:$0xf]
  %v613 = vld [vmem:[%s3 + $0xd8] sm:$0xf]
  %v614 = vld [vmem:[%s3 + $0xdc] sm:$0xf]
  %v615 = vld [vmem:[%s3 + $0xe0] sm:$0xf]
  %v616 = vld [vmem:[%s3 + $0xe4] sm:$0xf]
  %v617 = vld [vmem:[%s3 + $0xe8] sm:$0xf]
  %v618 = vld [vmem:[%s3 + $0xec] sm:$0xf]
  %v619 = vld [vmem:[%s3 + $0xf0] sm:$0xf]
  %v620 = vld [vmem:[%s3 + $0xf4] sm:$0xf]
  %v621 = vld [vmem:[%s3 + $0xf8] sm:$0xf]
  %v622 = vld [vmem:[%s3 + $0xfc] sm:$0xf]
  %v623 = vld [vmem:[%s3 + $0x100] sm:$0xf]
  %v624 = vld [vmem:[%s3 + $0x104] sm:$0xf]
  %v625 = vld [vmem:[%s3 + $0x108] sm:$0xf]
  %v626 = vld [vmem:[%s3 + $0x10c] sm:$0xf]
  %v627 = vld [vmem:[%s3 + $0x110] sm:$0xf]
  %v628 = vld [vmem:[%s3 + $0x114] sm:$0xf]
  %v629 = vld [vmem:[%s3 + $0x118] sm:$0xf]
  %v630 = vld [vmem:[%s3 + $0x11c] sm:$0xf]
  %v631 = vld [vmem:[%s3 + $0x120] sm:$0xf]
  %v632 = vld [vmem:[%s3 + $0x124] sm:$0xf]
  %v633 = vld [vmem:[%s3 + $0x128] sm:$0xf]
  %v634 = vld [vmem:[%s3 + $0x12c] sm:$0xf]
  %v635 = vld [vmem:[%s3 + $0x130] sm:$0xf]
  %v636 = vld [vmem:[%s3 + $0x134] sm:$0xf]
  %v637 = vld [vmem:[%s3 + $0x138] sm:$0xf]
  %v638 = vld [vmem:[%s3 + $0x13c] sm:$0xf]
  %v639 = vld [vmem:[%s3 + $0x140] sm:$0xf]
  %v640 = vld [vmem:[%s3 + $0x144] sm:$0xf]
  %v641 = vld [vmem:[%s3 + $0x148] sm:$0xf]
  %v642 = vld [vmem:[%s3 + $0x14c] sm:$0xf]
  %v643 = vld [vmem:[%s3 + $0x150] sm:$0xf]
  %v644 = vld [vmem:[%s3 + $0x154] sm:$0xf]
  %v645 = vld [vmem:[%s3 + $0x158] sm:$0xf]
  %v646 = vld [vmem:[%s3 + $0x15c] sm:$0xf]
  %v647 = vld [vmem:[%s3 + $0x160] sm:$0xf]
  %v648 = vld [vmem:[%s3 + $0x164] sm:$0xf]
  %v649 = vld [vmem:[%s3 + $0x168] sm:$0xf]
  %v650 = vld [vmem:[%s3 + $0x16c] sm:$0xf]
  %v651 = vld [vmem:[%s3 + $0x170] sm:$0xf]
  %v652 = vld [vmem:[%s3 + $0x174] sm:$0xf]
  %v653 = vld [vmem:[%s3 + $0x178] sm:$0xf]
  %v654 = vld [vmem:[%s3 + $0x17c] sm:$0xf]
  %v655 = vld [vmem:[%s3 + $0x180] sm:$0xf]
  %v656 = vld [vmem:[%s3 + $0x184] sm:$0xf]
  %v657 = vld [vmem:[%s3 + $0x188] sm:$0xf]
  %v658 = vld [vmem:[%s3 + $0x18c] sm:$0xf]
  %v659 = vld [vmem:[%s4] sm:$0x1]
  %v661 = vlaneseq
  %v662 = vshrl.u32 %v661, 7
  %v663 = vsub.s32 0, %v662
  %v664 = vrot.slane %v659, %v663
  %v766 = vunpack.c.l.b16 %v559
  %v767 = vunpack.c.l.b16 %v560
  %v768 = vunpack.c.l.b16 %v561
  %v769 = vunpack.c.l.b16 %v562
  %v770 = vunpack.c.l.b16 %v563
  %v771 = vunpack.c.l.b16 %v564
  %v772 = vunpack.c.l.b16 %v565
  %v773 = vunpack.c.l.b16 %v566
  %v774 = vunpack.c.l.b16 %v567
  %v775 = vunpack.c.l.b16 %v568
  %v776 = vunpack.c.l.b16 %v569
  %v777 = vunpack.c.l.b16 %v570
  %v778 = vunpack.c.l.b16 %v571
  %v779 = vunpack.c.l.b16 %v572
  %v780 = vunpack.c.l.b16 %v573
  %v781 = vunpack.c.l.b16 %v574
  %v782 = vunpack.c.l.b16 %v575
  %v783 = vunpack.c.l.b16 %v576
  %v784 = vunpack.c.l.b16 %v577
  %v785 = vunpack.c.l.b16 %v578
  %v786 = vunpack.c.l.b16 %v579
  %v787 = vunpack.c.l.b16 %v580
  %v788 = vunpack.c.l.b16 %v581
  %v789 = vunpack.c.l.b16 %v582
  %v790 = vunpack.c.l.b16 %v583
  %v791 = vunpack.c.l.b16 %v584
  %v792 = vunpack.c.l.b16 %v585
  %v793 = vunpack.c.l.b16 %v586
  %v794 = vunpack.c.l.b16 %v587
  %v795 = vunpack.c.l.b16 %v588
  %v796 = vunpack.c.l.b16 %v589
  %v797 = vunpack.c.l.b16 %v590
  %v798 = vunpack.c.l.b16 %v591
  %v799 = vunpack.c.l.b16 %v592
  %v800 = vunpack.c.l.b16 %v593
  %v801 = vunpack.c.l.b16 %v594
  %v802 = vunpack.c.l.b16 %v595
  %v803 = vunpack.c.l.b16 %v596
  %v804 = vunpack.c.l.b16 %v597
  %v805 = vunpack.c.l.b16 %v598
  %v806 = vunpack.c.l.b16 %v599
  %v807 = vunpack.c.l.b16 %v600
  %v808 = vunpack.c.l.b16 %v601
  %v809 = vunpack.c.l.b16 %v602
  %v810 = vunpack.c.l.b16 %v603
  %v811 = vunpack.c.l.b16 %v604
  %v812 = vunpack.c.l.b16 %v605
  %v813 = vunpack.c.l.b16 %v606
  %v814 = vunpack.c.l.b16 %v607
  %v815 = vunpack.c.l.b16 %v608
  %v816 = vunpack.c.l.b16 %v609
  %v817 = vunpack.c.l.b16 %v610
  %v818 = vunpack.c.l.b16 %v611
  %v819 = vunpack.c.l.b16 %v612
  %v820 = vunpack.c.l.b16 %v613
  %v821 = vunpack.c.l.b16 %v614
  %v822 = vunpack.c.l.b16 %v615
  %v823 = vunpack.c.l.b16 %v616
  %v824 = vunpack.c.l.b16 %v617
  %v825 = vunpack.c.l.b16 %v618
  %v826 = vunpack.c.l.b16 %v619
  %v827 = vunpack.c.l.b16 %v620
  %v828 = vunpack.c.l.b16 %v621
  %v829 = vunpack.c.l.b16 %v622
  %v830 = vunpack.c.l.b16 %v623
  %v831 = vunpack.c.l.b16 %v624
  %v832 = vunpack.c.l.b16 %v625
  %v833 = vunpack.c.l.b16 %v626
  %v834 = vunpack.c.l.b16 %v627
  %v835 = vunpack.c.l.b16 %v628
  %v836 = vunpack.c.l.b16 %v629
  %v837 = vunpack.c.l.b16 %v630
  %v838 = vunpack.c.l.b16 %v631
  %v839 = vunpack.c.l.b16 %v632
  %v840 = vunpack.c.l.b16 %v633
  %v841 = vunpack.c.l.b16 %v634
  %v842 = vunpack.c.l.b16 %v635
  %v843 = vunpack.c.l.b16 %v636
  %v844 = vunpack.c.l.b16 %v637
  %v845 = vunpack.c.l.b16 %v638
  %v846 = vunpack.c.l.b16 %v639
  %v847 = vunpack.c.l.b16 %v640
  %v848 = vunpack.c.l.b16 %v641
  %v849 = vunpack.c.l.b16 %v642
  %v850 = vunpack.c.l.b16 %v643
  %v851 = vunpack.c.l.b16 %v644
  %v852 = vunpack.c.l.b16 %v645
  %v853 = vunpack.c.l.b16 %v646
  %v854 = vunpack.c.l.b16 %v647
  %v855 = vunpack.c.l.b16 %v648
  %v856 = vunpack.c.l.b16 %v649
  %v857 = vunpack.c.l.b16 %v650
  %v858 = vunpack.c.l.b16 %v651
  %v859 = vunpack.c.l.b16 %v652
  %v860 = vunpack.c.l.b16 %v653
  %v861 = vunpack.c.l.b16 %v654
  %v862 = vunpack.c.l.b16 %v655
  %v863 = vunpack.c.l.b16 %v656
  %v864 = vunpack.c.l.b16 %v657
  %v865 = vunpack.c.l.b16 %v658
  %v866 = vpack.c.b16 %v767, %v766
  %v867 = vpack.c.b16 %v769, %v768
  %v868 = vpack.c.b16 %v771, %v770
  %v869 = vpack.c.b16 %v773, %v772
  %v870 = vpack.c.b16 %v775, %v774
  %v871 = vpack.c.b16 %v777, %v776
  %v872 = vpack.c.b16 %v779, %v778
  %v873 = vpack.c.b16 %v781, %v780
  %v874 = vpack.c.b16 %v783, %v782
  %v875 = vpack.c.b16 %v785, %v784
  %v876 = vpack.c.b16 %v787, %v786
  %v877 = vpack.c.b16 %v789, %v788
  %v878 = vpack.c.b16 %v791, %v790
  %v879 = vpack.c.b16 %v793, %v792
  %v880 = vpack.c.b16 %v795, %v794
  %v881 = vpack.c.b16 %v797, %v796
  %v882 = vpack.c.b16 %v799, %v798
  %v883 = vpack.c.b16 %v801, %v800
  %v884 = vpack.c.b16 %v803, %v802
  %v885 = vpack.c.b16 %v805, %v804
  %v886 = vpack.c.b16 %v807, %v806
  %v887 = vpack.c.b16 %v809, %v808
  %v888 = vpack.c.b16 %v811, %v810
  %v889 = vpack.c.b16 %v813, %v812
  %v890 = vpack.c.b16 %v815, %v814
  %v891 = vpack.c.b16 %v817, %v816
  %v892 = vpack.c.b16 %v819, %v818
  %v893 = vpack.c.b16 %v821, %v820
  %v894 = vpack.c.b16 %v823, %v822
  %v895 = vpack.c.b16 %v825, %v824
  %v896 = vpack.c.b16 %v827, %v826
  %v897 = vpack.c.b16 %v829, %v828
  %v898 = vpack.c.b16 %v831, %v830
  %v899 = vpack.c.b16 %v833, %v832
  %v900 = vpack.c.b16 %v835, %v834
  %v901 = vpack.c.b16 %v837, %v836
  %v902 = vpack.c.b16 %v839, %v838
  %v903 = vpack.c.b16 %v841, %v840
  %v904 = vpack.c.b16 %v843, %v842
  %v905 = vpack.c.b16 %v845, %v844
  %v906 = vpack.c.b16 %v847, %v846
  %v907 = vpack.c.b16 %v849, %v848
  %v908 = vpack.c.b16 %v851, %v850
  %v909 = vpack.c.b16 %v853, %v852
  %v910 = vpack.c.b16 %v855, %v854
  %v911 = vpack.c.b16 %v857, %v856
  %v912 = vpack.c.b16 %v859, %v858
  %v913 = vpack.c.b16 %v861, %v860
  %v914 = vpack.c.b16 %v863, %v862
  %v915 = vpack.c.b16 %v865, %v864
  %v967 = vsel %vm439, %v558, 0
  %969 = vmatprep.subr.bf16.mxu0 0
  %970 = vmatpush1.bf16.msra.mxu0 %v866
  %971 = vmatprep.subr.bf16.mxu0 0
  %972 = vmatpush1.bf16.msra.mxu0 %v867
  %973 = vmatprep.subr.bf16.mxu0 0
  %974 = vmatpush1.bf16.msra.mxu0 %v868
  %975 = vmatprep.subr.bf16.mxu0 0
  %976 = vmatpush1.bf16.msra.mxu0 %v869
  %977 = vmatprep.subr.bf16.mxu0 0
  %978 = vmatpush1.bf16.msra.mxu0 %v870
  %979 = vmatprep.subr.bf16.mxu0 0
  %980 = vmatpush1.bf16.msra.mxu0 %v871
  %981 = vmatprep.subr.bf16.mxu0 0
  %982 = vmatpush1.bf16.msra.mxu0 %v872
  %983 = vmatprep.subr.bf16.mxu0 0
  %984 = vmatpush1.bf16.msra.mxu0 %v873
  %985 = vmatprep.subr.bf16.mxu0 0
  %986 = vmatpush1.bf16.msra.mxu0 %v874
  %987 = vmatprep.subr.bf16.mxu0 0
  %988 = vmatpush1.bf16.msra.mxu0 %v875
  %989 = vmatprep.subr.bf16.mxu0 0
  %990 = vmatpush1.bf16.msra.mxu0 %v876
  %991 = vmatprep.subr.bf16.mxu0 0
  %992 = vmatpush1.bf16.msra.mxu0 %v877
  %993 = vmatprep.subr.bf16.mxu0 0
  %994 = vmatpush1.bf16.msra.mxu0 %v878
  %995 = vmatprep.subr.bf16.mxu0 0
  %996 = vmatpush1.bf16.msra.mxu0 %v879
  %997 = vmatprep.subr.bf16.mxu0 0
  %998 = vmatpush1.bf16.msra.mxu0 %v880
  %999 = vmatprep.subr.bf16.mxu0 0
  %1000 = vmatpush1.bf16.msra.mxu0 %v881
  %1001 = vmatprep.mubr.bf16.mxu0 %v553
  %1002 = vmatmul.mubr.bf16.gmra.mrb[0].mxu0 %v552
  %v1003 = vpop.f32.mrb[0].mxu0
  %v1004 = vadd.f32 %v664, %v1003
  %v1005 = vpop.f32.mrb[0].mxu0
  %v1006 = vpop.f32.mrb[0].mxu0
  %v1007 = vadd.f32 %v664, %v1006
  %v1008 = vpop.f32.mrb[0].mxu0
  %1009 = vdwg.mxu0
  %1010 = vmatprep.subr.bf16.mxu0 0
  %1011 = vmatpush1.bf16.msra.mxu0 %v882
  %1012 = vmatprep.subr.bf16.mxu0 0
  %1013 = vmatpush1.bf16.msra.mxu0 %v883
  %1014 = vmatprep.subr.bf16.mxu0 0
  %1015 = vmatpush1.bf16.msra.mxu0 %v884
  %1016 = vmatprep.subr.bf16.mxu0 0
  %1017 = vmatpush1.bf16.msra.mxu0 %v885
  %1018 = vmatprep.subr.bf16.mxu0 0
  %1019 = vmatpush1.bf16.msra.mxu0 %v886
  %1020 = vmatprep.subr.bf16.mxu0 0
  %1021 = vmatpush1.bf16.msra.mxu0 %v887
  %1022 = vmatprep.subr.bf16.mxu0 0
  %1023 = vmatpush1.bf16.msra.mxu0 %v888
  %1024 = vmatprep.subr.bf16.mxu0 0
  %1025 = vmatpush1.bf16.msra.mxu0 %v889
  %1026 = vmatprep.subr.bf16.mxu0 0
  %1027 = vmatpush1.bf16.msra.mxu0 %v890
  %1028 = vmatprep.subr.bf16.mxu0 0
  %1029 = vmatpush1.bf16.msra.mxu0 %v891
  %1030 = vmatprep.subr.bf16.mxu0 0
  %1031 = vmatpush1.bf16.msra.mxu0 %v892
  %1032 = vmatprep.subr.bf16.mxu0 0
  %1033 = vmatpush1.bf16.msra.mxu0 %v893
  %1034 = vmatprep.subr.bf16.mxu0 0
  %1035 = vmatpush1.bf16.msra.mxu0 %v894
  %1036 = vmatprep.subr.bf16.mxu0 0
  %1037 = vmatpush1.bf16.msra.mxu0 %v895
  %1038 = vmatprep.subr.bf16.mxu0 0
  %1039 = vmatpush1.bf16.msra.mxu0 %v896
  %1040 = vmatprep.subr.bf16.mxu0 0
  %1041 = vmatpush1.bf16.msra.mxu0 %v897
  %1042 = vmatprep.mubr.bf16.mxu0 %v555
  %1043 = vmatmul.mubr.bf16.gmra.mrb[0].mxu0 %v554
  %v1044 = vpop.f32.mrb[0].mxu0
  %v1045 = vadd.f32 %v1004, %v1044
  %v1046 = vpop.f32.mrb[0].mxu0
  %v1047 = vpop.f32.mrb[0].mxu0
  %v1048 = vadd.f32 %v1007, %v1047
  %v1049 = vpop.f32.mrb[0].mxu0
  %1050 = vdwg.mxu0
  %1051 = vmatprep.subr.bf16.mxu0 0
  %1052 = vmatpush1.bf16.msra.mxu0 %v898
  %1053 = vmatprep.subr.bf16.mxu0 0
  %1054 = vmatpush1.bf16.msra.mxu0 %v899
  %1055 = vmatprep.subr.bf16.mxu0 0
  %1056 = vmatpush1.bf16.msra.mxu0 %v900
  %1057 = vmatprep.subr.bf16.mxu0 0
  %1058 = vmatpush1.bf16.msra.mxu0 %v901
  %1059 = vmatprep.subr.bf16.mxu0 0
  %1060 = vmatpush1.bf16.msra.mxu0 %v902
  %1061 = vmatprep.subr.bf16.mxu0 0
  %1062 = vmatpush1.bf16.msra.mxu0 %v903
  %1063 = vmatprep.subr.bf16.mxu0 0
  %1064 = vmatpush1.bf16.msra.mxu0 %v904
  %1065 = vmatprep.subr.bf16.mxu0 0
  %1066 = vmatpush1.bf16.msra.mxu0 %v905
  %1067 = vmatprep.subr.bf16.mxu0 0
  %1068 = vmatpush1.bf16.msra.mxu0 %v906
  %1069 = vmatprep.subr.bf16.mxu0 0
  %1070 = vmatpush1.bf16.msra.mxu0 %v907
  %1071 = vmatprep.subr.bf16.mxu0 0
  %1072 = vmatpush1.bf16.msra.mxu0 %v908
  %1073 = vmatprep.subr.bf16.mxu0 0
  %1074 = vmatpush1.bf16.msra.mxu0 %v909
  %1075 = vmatprep.subr.bf16.mxu0 0
  %1076 = vmatpush1.bf16.msra.mxu0 %v910
  %1077 = vmatprep.subr.bf16.mxu0 0
  %1078 = vmatpush1.bf16.msra.mxu0 %v911
  %1079 = vmatprep.subr.bf16.mxu0 0
  %1080 = vmatpush1.bf16.msra.mxu0 %v912
  %1081 = vmatprep.subr.bf16.mxu0 0
  %1082 = vmatpush1.bf16.msra.mxu0 %v913
  %1083 = vmatprep.mubr.bf16.mxu0 %v557
  %1084 = vmatmul.mubr.bf16.gmra.mrb[0].mxu0 %v556
  %v1085 = vpop.f32.mrb[0].mxu0
  %v1086 = vadd.f32 %v1045, %v1085
  %v1087 = vpop.f32.mrb[0].mxu0
  %v1088 = vpop.f32.mrb[0].mxu0
  %v1089 = vadd.f32 %v1048, %v1088
  %v1090 = vpop.f32.mrb[0].mxu0
  %1091 = vdwg.mxu0
  %1092 = vmatprep.subr.bf16.mxu0 0
  %1093 = vmatpush1.bf16.msra.mxu0 %v914
  %1094 = vmatprep.subr.bf16.mxu0 0
  %1095 = vmatpush1.bf16.msra.mxu0 %v915
  %1096 = vmatprep.subr.bf16.mxu0 0
  %1097 = vmatpush1.bf16.msra.mxu0 0
  %1098 = vmatprep.subr.bf16.mxu0 0
  %1099 = vmatpush1.bf16.msra.mxu0 0
  %1100 = vmatprep.subr.bf16.mxu0 0
  %1101 = vmatpush1.bf16.msra.mxu0 0
  %1102 = vmatprep.subr.bf16.mxu0 0
  %1103 = vmatpush1.bf16.msra.mxu0 0
  %1104 = vmatprep.subr.bf16.mxu0 0
  %1105 = vmatpush1.bf16.msra.mxu0 0
  %1106 = vmatprep.subr.bf16.mxu0 0
  %1107 = vmatpush1.bf16.msra.mxu0 0
  %1108 = vmatprep.subr.bf16.mxu0 0
  %1109 = vmatpush1.bf16.msra.mxu0 0
  %1110 = vmatprep.subr.bf16.mxu0 0
  %1111 = vmatpush1.bf16.msra.mxu0 0
  %1112 = vmatprep.subr.bf16.mxu0 0
  %1113 = vmatpush1.bf16.msra.mxu0 0
  %1114 = vmatprep.subr.bf16.mxu0 0
  %1115 = vmatpush1.bf16.msra.mxu0 0
  %1116 = vmatprep.subr.bf16.mxu0 0
  %1117 = vmatpush1.bf16.msra.mxu0 0
  %1118 = vmatprep.subr.bf16.mxu0 0
  %1119 = vmatpush1.bf16.msra.mxu0 0
  %1120 = vmatprep.subr.bf16.mxu0 0
  %1121 = vmatpush1.bf16.msra.mxu0 0
  %1122 = vmatprep.subr.bf16.mxu0 0
  %1123 = vmatpush1.bf16.msra.mxu0 0
  %1124 = vmatprep.mubr.bf16.mxu0 0
  %1125 = vmatmul.mubr.bf16.gmra.mrb[0].mxu0 %v967
  %v1126 = vpop.f32.mrb[0].mxu0
  %v1127 = vadd.f32 %v1086, %v1126
  %v1128 = vpop.f32.mrb[0].mxu0
  %v1129 = vpop.f32.mrb[0].mxu0
  %v1130 = vadd.f32 %v1089, %v1129
  %v1131 = vpop.f32.mrb[0].mxu0
  %1132 = vdwg.mxu0
  %v1133 = vmax.f32 %v1127, 0.0
  %v1134 = vmax.f32 %v1130, 0.0
  %vm1135 = vcmask 195584
  %1136 = vst.msk [vmem:[%s5] sm:$0xff] %vm1135, %v1133
  %vm1137 = vcmask 191488
  %1138 = vst.msk [vmem:[%s5 + $0x8] sm:$0xf] %vm1137, %v1134
  // Predicated region
  $region22: #{model_forward.1} parent=0 // pred_check
    _
  $region23: #{model_forward.1} parent=0 // pred_check_branch
    %1140 = sbr.rel (0) target = $region25
  $region24: #{model_forward.1} parent=0 // pred_region
    _
  $region25: #{model_forward.1} parent=0 // pred_fallthru
    _
  // Predicated region
  $region26: #{model_forward.1} parent=0 // pred_check
    _
  $region27: #{model_forward.1} parent=0 // pred_check_branch
    %1142 = sbr.rel (0) target = $region29
  $region28: #{model_forward.1} parent=0 // pred_region
    _
  $region29: #{model_forward.1} parent=0 // pred_fallthru
    _

</llo_original>
